<compile_context>
chip_gen: v6e
topology: v6e:2x2x1
jax: 0.10.0
libtpu: 0.0.40
codegen_flags: <defaults>
</compile_context>

<pallas_src>
import math

import jax
import jax.numpy as jnp
from jax.experimental import pallas as pl
from jax.experimental.pallas import tpu as pltpu

_LANE = 128


def _round_up(n, m=_LANE):
    return ((n + m - 1) // m) * m


def _vmem_capacity_bytes(default_bytes=64 << 20):
    """Physical VMEM capacity of the local TPU; falls back to v7x's 64 MiB."""
    try:
        info = pltpu.get_tpu_info()
    except Exception:
        return default_bytes
    for attr in ("vmem_capacity_bytes", "vmem_size_bytes", "vmem_bytes"):
        try:
            val = int(getattr(info, attr))
        except (AttributeError, TypeError, ValueError):
            continue
        if val > 0:
            return val
    return default_bytes


# ---------------------------------------------------------------------------
# Fused kernel: (layer-1 via linearity) -> hidden MLP stack -> final matmul
# with folded alpha logit -> slot softmax -> weighted-sum reconstruction.
# Single invocation over all batch elements (M = B*S*P rows).
# ---------------------------------------------------------------------------
def _make_fused_decoder_kernel(B, S, P, O, NPAD, n_extra_hidden):
    def kernel(*refs):
        z_ref, posh_ref, w1_ref = refs[0], refs[1], refs[2]
        rec_ref, masks_ref = refs[-2], refs[-1]
        params = refs[3:-2]  # (w, b) pairs for hidden layers 2.., then final

        BS = B * S
        H1p = posh_ref.shape[-1]

        # ---- layer 1 via linearity: z @ W1 (tiny) + precomputed pos@W1+b1
        zh = jnp.dot(z_ref[...].astype(jnp.bfloat16), w1_ref[...],
                     preferred_element_type=jnp.float32)              # (BS, H1p)
        x = zh[:, None, :] + posh_ref[...][None, :, :]                # (BS, P, H1p)
        h = jnp.maximum(x, 0.0).reshape(BS * P, H1p).astype(jnp.bfloat16)

        # ---- remaining hidden Linear + ReLU layers (bf16 MXU, f32 accumulate)
        for l in range(n_extra_hidden):
            w_ref, b_ref = params[2 * l], params[2 * l + 1]
            acc = jnp.dot(h, w_ref[...],
                          preferred_element_type=jnp.float32) + b_ref[...]
            h = jnp.maximum(acc, 0.0).astype(jnp.bfloat16)

        # ---- final Linear: alpha logit rides along as column O of a 128-wide
        #      zero-padded weight (lane-dense MXU result, no lane reduction).
        wl_ref, bl_ref = params[-2], params[-1]
        out = jnp.dot(h, wl_ref[...],
                      preferred_element_type=jnp.float32) + bl_ref[...]  # (BS*P, NPAD)
        out4 = out.reshape(B, S, P, NPAD)

        # ---- slot softmax over S + weighted-sum reconstruction (in-register)
        logit = out4[..., O:O + 1]                                    # (B, S, P, 1)
        m = jnp.max(logit, axis=1, keepdims=True)
        e = jnp.exp(logit - m)
        denom = jnp.sum(e, axis=1, keepdims=True)
        alpha = e * pl.reciprocal(denom, approx=True)                 # (B, S, P, 1)

        # Padded columns of `out` are exactly zero and column O (the logit) is
        # sliced off in the wrapper, so summing the full 128-lane tile keeps
        # the store dense and the result exact.
        rec_ref[...] = jnp.sum(out4 * alpha, axis=1).astype(rec_ref.dtype)
        masks_ref[...] = alpha.astype(masks_ref.dtype)

    return kernel


def mlp_decoder_fused(z, pos, weights, biases, dec_output_dim):
    """z: (B, S, D); pos: (P, D); weights[i]: (in, out); biases[i]: (1, out).

    Returns (reconstruction (B, P, O), masks (B, S, P)).
    """
    B, S, D = z.shape
    P, _ = pos.shape
    O = dec_output_dim
    num_hidden = len(weights) - 1
    assert num_hidden >= 1, "expects at least one hidden layer"

    f32, bf16 = jnp.float32, jnp.bfloat16
    NPAD = _round_up(O + 1)

    # ---- layer 1: pad width to a 128 multiple, fold pos@W1 + b1 into a table.
    w1 = weights[0].astype(f32)                       # (D, H1)
    b1 = biases[0].astype(f32)                        # (1, H1)
    H1 = w1.shape[1]
    H1p = _round_up(H1)
    w1p = jnp.pad(w1, ((0, 0), (0, H1p - H1)))
    b1p = jnp.pad(b1, ((0, 0), (0, H1p - H1)))
    pos_h1 = pos.astype(f32) @ w1p + b1p              # (P, H1p), exact f32
    w1_k = w1p.astype(bf16)

    # ---- remaining hidden layers, zero-padded to 128 multiples (exact:
    #      padded inputs are zero and padded weight rows are zero).
    params = []
    in_pad = H1p
    for w, b in zip(weights[1:num_hidden], biases[1:num_hidden]):
        h_in, h_out = w.shape
        outp = _round_up(h_out)
        wp = jnp.pad(w.astype(f32),
                     ((0, in_pad - h_in), (0, outp - h_out))).astype(bf16)
        bp = jnp.pad(b.astype(f32), ((0, 0), (0, outp - h_out)))
        params += [wp, bp]
        in_pad = outp

    # ---- final layer: alpha logit folded in as column O; pad cols to NPAD.
    wl = weights[-1].astype(f32)                      # (H_last, O+1)
    bl = biases[-1].astype(f32)                       # (1, O+1)
    wlp = jnp.pad(wl, ((0, in_pad - wl.shape[0]),
                       (0, NPAD - wl.shape[1]))).astype(bf16)
    blp = jnp.pad(bl, ((0, 0), (0, NPAD - bl.shape[1])))
    params += [wlp, blp]

    z2 = z.reshape(B * S, D).astype(f32)

    out_shape = (jax.ShapeDtypeStruct((B, P, NPAD), f32),     # padded rec
                 jax.ShapeDtypeStruct((B, S, P, 1), f32))     # alpha masks

    # VMEM budget: single-buffered resident operands (no grid => no pipeline
    # double-buffering) + rough activation footprint, capped at ~85% of the
    # generation's physical VMEM (queried from the hardware).
    operands = [z2, pos_h1, w1_k] + params
    param_bytes = sum(int(a.size) * a.dtype.itemsize for a in operands)
    out_bytes = (B * P * NPAD + B * S * P) * 4
    widths = [H1p] + [int(b.shape[-1]) for b in params[1::2]]
    act_bytes = B * S * P * sum(widths) * 6          # f32 accum + bf16 copy
    est = param_bytes + out_bytes + act_bytes + (4 << 20)
    cap = _vmem_capacity_bytes()
    vmem_limit = int(min(max(est, 16 << 20), int(0.85 * cap)))

    rec_pad, masks4 = pl.pallas_call(
        _make_fused_decoder_kernel(B, S, P, O, NPAD, num_hidden - 1),
        out_shape=out_shape,
        compiler_params=pltpu.CompilerParams(vmem_limit_bytes=vmem_limit),
    )(z2, pos_h1, w1_k, *params)

    reconstruction = rec_pad[..., :O]                 # (B, P, O)
    masks = masks4[..., 0]                            # (B, S, P)
    return reconstruction, masks


# ---------------------------------------------------------------------------
# Glue: patches -> image bilinear resize (matches F.interpolate 'bilinear',
# align_corners=False, for upsampling).  Kept in plain JAX.
# TODO(synk): bilinear resize stays as jax.image.resize glue (no Pallas kernel).
# ---------------------------------------------------------------------------
def resize_patches_to_image(masks, size):
    B, S, P = masks.shape
    p = int(round(math.sqrt(P)))
    imgs = masks.reshape(B * S, p, p)
    out = jax.image.resize(imgs, (B * S, size, size), method="bilinear")
    return out.reshape(B, S, size, size)


# ---------------------------------------------------------------------------
# Full forward (mirrors MLPDecoder.forward for z of shape (B, S, D))
# ---------------------------------------------------------------------------
def mlp_decoder_forward(z, pos, weights, biases, dec_output_dim, resolution):
    reconstruction, masks = mlp_decoder_fused(z, pos, weights, biases,
                                              dec_output_dim)
    masks_as_image = resize_patches_to_image(masks, resolution)
    return reconstruction, masks, masks_as_image


# ---------------------------------------------------------------------------
# Pure-JAX f32 reference (for correctness check)
# ---------------------------------------------------------------------------
def reference(z, pos, weights, biases, dec_output_dim):
    B, S, D = z.shape
    P = pos.shape[0]
    O = dec_output_dim
    x = z.reshape(B * S, 1, D) + pos[None]            # (N, P, D)
    for l, (w, b) in enumerate(zip(weights, biases)):
        x = x @ w + b
        if l < len(weights) - 1:
            x = jnp.maximum(x, 0.0)
    y = x.reshape(B, S, P, O + 1)
    dec, logit = y[..., :O], y[..., O:]
    alpha = jax.nn.softmax(logit, axis=1)
    rec = jnp.sum(dec * alpha, axis=1)
    masks = alpha[..., 0]
    return rec, masks


if __name__ == "__main__":
    config = dict(dec_input_dim=32, dec_hidden_layers=[64, 64],
                  dec_output_dim=32, vit_num_patches=16, resolution=8)
    B, S = 2, 4
    D = config["dec_input_dim"]
    H_list = config["dec_hidden_layers"]
    O = config["dec_output_dim"]
    P = config["vit_num_patches"]

    dims = [D] + list(H_list) + [O + 1]
    n_layers = len(dims) - 1

    key = jax.random.PRNGKey(0)
    keys = jax.random.split(key, 2 + 2 * n_layers)

    z = jax.random.normal(keys[0], (B, S, D), jnp.float32)
    # pos_embed ~ randn * 0.02 (torch keeps a leading 1-dim; dropped here)
    pos = jax.random.normal(keys[1], (P, D), jnp.float32) * 0.02

    # synthetic Linear params: weights (in, out); small random biases to
    # exercise the bias path (torch zero-inits them, semantics identical).
    weights, biases = [], []
    for li in range(n_layers):
        fan_in, fan_out = dims[li], dims[li + 1]
        w = jax.random.normal(keys[2 + li], (fan_in, fan_out),
                              jnp.float32) * (1.0 / math.sqrt(fan_in))
        b = jax.random.normal(keys[2 + n_layers + li], (1, fan_out),
                              jnp.float32) * 0.1
        weights.append(w)
        biases.append(b)

    reconstruction, masks, masks_as_image = mlp_decoder_forward(
        z, pos, weights, biases, O, config["resolution"])
    jax.block_until_ready((reconstruction, masks, masks_as_image))

    # shape checks
    assert reconstruction.shape == (B, P, O)
    assert masks.shape == (B, S, P)
    assert masks_as_image.shape == (B, S, config["resolution"],
                                    config["resolution"])

    # numerical check against pure-JAX f32 reference (kernel matmuls run in
    # bf16 with f32 accumulation, approx reciprocal in the softmax ->
    # loosened tolerances)
    rec_ref, masks_ref = reference(z, pos, weights, biases, O)
    assert jnp.allclose(reconstruction, rec_ref, rtol=5e-2, atol=5e-2)
    assert jnp.allclose(masks, masks_ref, rtol=5e-2, atol=3e-2)

    print("KERNEL_OK")
</pallas_src>

<mosaic_0001>
module attributes {stable_mosaic.version = 11 : i64} {
  func.func @kernel(%arg0: memref<8x32xf32, #tpu.memory_space<vmem>>, %arg1: memref<16x128xf32, #tpu.memory_space<vmem>>, %arg2: memref<32x128xbf16, #tpu.memory_space<vmem>>, %arg3: memref<128x128xbf16, #tpu.memory_space<vmem>>, %arg4: memref<1x128xf32, #tpu.memory_space<vmem>>, %arg5: memref<128x128xbf16, #tpu.memory_space<vmem>>, %arg6: memref<1x128xf32, #tpu.memory_space<vmem>>, %arg7: memref<2x16x128xf32, #tpu.memory_space<vmem>>, %arg8: memref<2x4x16x1xf32, #tpu.memory_space<vmem>>) attributes {dimension_semantics = [], scalar_prefetch = 0 : i64, scratch_operands = 0 : i64, tpu.core_type = #tpu.core_type<tc>} {
    %c0 = arith.constant 0 : index
    %c0_0 = arith.constant 0 : index
    %0 = vector.load %arg0[%c0, %c0_0] : memref<8x32xf32, #tpu.memory_space<vmem>>, vector<8x32xf32>
    %1 = arith.truncf %0 : vector<8x32xf32> to vector<8x32xbf16>
    %c0_1 = arith.constant 0 : index
    %c0_2 = arith.constant 0 : index
    %2 = vector.load %arg2[%c0_1, %c0_2] : memref<32x128xbf16, #tpu.memory_space<vmem>>, vector<32x128xbf16>
    %cst = arith.constant dense<0.000000e+00> : vector<8x128xf32>
    %3 = tpu.matmul %1, %2, %cst {dimension_numbers = #tpu.dot_dimension_numbers<[1], [0], [0], [1], [0, 0, 1, 1], [], []>} : vector<8x32xbf16>, vector<32x128xbf16>, vector<8x128xf32> -> vector<8x128xf32>
    %4 = vector.shape_cast %3 : vector<8x128xf32> to vector<8x1x128xf32>
    %c0_3 = arith.constant 0 : index
    %c0_4 = arith.constant 0 : index
    %5 = vector.load %arg1[%c0_3, %c0_4] : memref<16x128xf32, #tpu.memory_space<vmem>>, vector<16x128xf32>
    %6 = vector.shape_cast %5 : vector<16x128xf32> to vector<1x16x128xf32>
    %7 = vector.broadcast %4 : vector<8x1x128xf32> to vector<8x16x128xf32>
    %8 = vector.broadcast %6 : vector<1x16x128xf32> to vector<8x16x128xf32>
    %9 = arith.addf %7, %8 : vector<8x16x128xf32>
    %cst_5 = arith.constant 0.000000e+00 : f32
    %10 = vector.broadcast %cst_5 : f32 to vector<8x16x128xf32>
    %11 = arith.maximumf %9, %10 : vector<8x16x128xf32>
    %12 = vector.shape_cast %11 : vector<8x16x128xf32> to vector<128x128xf32>
    %13 = arith.truncf %12 : vector<128x128xf32> to vector<128x128xbf16>
    %c0_6 = arith.constant 0 : index
    %c0_7 = arith.constant 0 : index
    %14 = vector.load %arg3[%c0_6, %c0_7] : memref<128x128xbf16, #tpu.memory_space<vmem>>, vector<128x128xbf16>
    %cst_8 = arith.constant dense<0.000000e+00> : vector<128x128xf32>
    %15 = tpu.matmul %13, %14, %cst_8 {dimension_numbers = #tpu.dot_dimension_numbers<[1], [0], [0], [1], [0, 0, 1, 1], [], []>} : vector<128x128xbf16>, vector<128x128xbf16>, vector<128x128xf32> -> vector<128x128xf32>
    %c0_9 = arith.constant 0 : index
    %c0_10 = arith.constant 0 : index
    %16 = vector.load %arg4[%c0_9, %c0_10] : memref<1x128xf32, #tpu.memory_space<vmem>>, vector<1x128xf32>
    %17 = vector.broadcast %16 : vector<1x128xf32> to vector<128x128xf32>
    %18 = arith.addf %15, %17 : vector<128x128xf32>
    %cst_11 = arith.constant 0.000000e+00 : f32
    %19 = vector.broadcast %cst_11 : f32 to vector<128x128xf32>
    %20 = arith.maximumf %18, %19 : vector<128x128xf32>
    %21 = arith.truncf %20 : vector<128x128xf32> to vector<128x128xbf16>
    %c0_12 = arith.constant 0 : index
    %c0_13 = arith.constant 0 : index
    %22 = vector.load %arg5[%c0_12, %c0_13] : memref<128x128xbf16, #tpu.memory_space<vmem>>, vector<128x128xbf16>
    %cst_14 = arith.constant dense<0.000000e+00> : vector<128x128xf32>
    %23 = tpu.matmul %21, %22, %cst_14 {dimension_numbers = #tpu.dot_dimension_numbers<[1], [0], [0], [1], [0, 0, 1, 1], [], []>} : vector<128x128xbf16>, vector<128x128xbf16>, vector<128x128xf32> -> vector<128x128xf32>
    %c0_15 = arith.constant 0 : index
    %c0_16 = arith.constant 0 : index
    %24 = vector.load %arg6[%c0_15, %c0_16] : memref<1x128xf32, #tpu.memory_space<vmem>>, vector<1x128xf32>
    %25 = vector.broadcast %24 : vector<1x128xf32> to vector<128x128xf32>
    %26 = arith.addf %23, %25 : vector<128x128xf32>
    %27 = vector.shape_cast %26 : vector<128x128xf32> to vector<2x4x16x128xf32>
    %28 = vector.extract_strided_slice %27 {offsets = [0, 0, 0, 32], sizes = [2, 4, 16, 1], strides = [1, 1, 1, 1]} : vector<2x4x16x128xf32> to vector<2x4x16x1xf32>
    %cst_17 = arith.constant dense<0xFF800000> : vector<2x16x1xf32>
    %29 = vector.multi_reduction <maximumf>, %28, %cst_17 [1] : vector<2x4x16x1xf32> to vector<2x16x1xf32>
    %30 = vector.shape_cast %29 : vector<2x16x1xf32> to vector<2x1x16x1xf32>
    %31 = vector.broadcast %30 : vector<2x1x16x1xf32> to vector<2x4x16x1xf32>
    %32 = arith.subf %28, %31 : vector<2x4x16x1xf32>
    %33 = math.exp %32 : vector<2x4x16x1xf32>
    %cst_18 = arith.constant dense<0.000000e+00> : vector<2x16x1xf32>
    %34 = vector.multi_reduction <add>, %33, %cst_18 [1] : vector<2x4x16x1xf32> to vector<2x16x1xf32>
    %35 = vector.shape_cast %34 : vector<2x16x1xf32> to vector<2x1x16x1xf32>
    %36 = tpu.reciprocal %35 {approx = true} : vector<2x1x16x1xf32> -> vector<2x1x16x1xf32>
    %37 = vector.broadcast %36 : vector<2x1x16x1xf32> to vector<2x4x16x1xf32>
    %38 = arith.mulf %33, %37 : vector<2x4x16x1xf32>
    %39 = vector.broadcast %38 : vector<2x4x16x1xf32> to vector<2x4x16x128xf32>
    %40 = arith.mulf %27, %39 : vector<2x4x16x128xf32>
    %cst_19 = arith.constant dense<0.000000e+00> : vector<2x16x128xf32>
    %41 = vector.multi_reduction <add>, %40, %cst_19 [1] : vector<2x4x16x128xf32> to vector<2x16x128xf32>
    %c0_20 = arith.constant 0 : index
    %c0_21 = arith.constant 0 : index
    %c0_22 = arith.constant 0 : index
    %42 = vector.load %arg7[%c0_20, %c0_21, %c0_22] : memref<2x16x128xf32, #tpu.memory_space<vmem>>, vector<2x16x128xf32>
    tpu.vector_store %arg7[%c0_20, %c0_21, %c0_22], %41 {strides = array<i32>} : memref<2x16x128xf32, #tpu.memory_space<vmem>>, vector<2x16x128xf32>,
    %c0_23 = arith.constant 0 : index
    %c0_24 = arith.constant 0 : index
    %c0_25 = arith.constant 0 : index
    %c0_26 = arith.constant 0 : index
    %43 = vector.load %arg8[%c0_23, %c0_24, %c0_25, %c0_26] : memref<2x4x16x1xf32, #tpu.memory_space<vmem>>, vector<2x4x16x1xf32>
    tpu.vector_store %arg8[%c0_23, %c0_24, %c0_25, %c0_26], %38 {strides = array<i32>} : memref<2x4x16x1xf32, #tpu.memory_space<vmem>>, vector<2x4x16x1xf32>,
    return
  }
}

</mosaic_0001>

<llo_original>
// kernel: tpu_custom_call.1
$region0: #{tpu_custom_call.1}
  #allocation0 [shape = 'u32[]', space=smem, size = 0x4, offset = 0x4, fixed_abs, tag = 'smem constant byte address 0x4 - core index']
  #allocation1 [shape = 'u32[144,128]{1,0:T(1,128)}', space=vmem, size = 0x12000, scoped, tag = 'internal scratch']
  %s0 = inlined_call_operand.hbm [shape: f32[8,32], index: 0, kind: input, shape index: {}]
  %s1 = inlined_call_operand.hbm [shape: f32[16,128], index: 1, kind: input, shape index: {}]
  %s2 = inlined_call_operand.hbm [shape: bf16[32,128], index: 2, kind: input, shape index: {}]
  %s3 = inlined_call_operand.hbm [shape: bf16[128,128], index: 3, kind: input, shape index: {}]
  %s4 = inlined_call_operand.vmem [shape: f32[1,128], index: 4, kind: input, shape index: {}]
  %s5 = inlined_call_operand.hbm [shape: bf16[128,128], index: 5, kind: input, shape index: {}]
  %s6 = inlined_call_operand.vmem [shape: f32[1,128], index: 6, kind: input, shape index: {}]
  %s7 = inlined_call_operand.hbm [shape: f32[2,16,128], index: 7, kind: output, shape index: {0}]
  %s8 = inlined_call_operand.vmem [shape: f32[2,4,16,1], index: 8, kind: output, shape index: {1}]
  %9 = xla_tuple %s7, %s8
  %s10 = sld [smem:[#allocation0]]
  $region66: #{tpu_custom_call.1} parent=0
    _
  %s12 = ssub.s32 1, %s10
  %s13 = scalar_select 0, %s12, %s10
  $region1: #{tpu_custom_call.1} parent=0
    #allocation2 [shape = 'u8[4096]{0}', space=vmem, size = 0x1000, scoped, tag = 'input window, operand 0, single buffered']
    #allocation3 [shape = 's32[1]{0}', space=sflag, size = 0x4, scoped, tag = 'scoped memory for tpu_custom_call.1']
    #allocation4 [shape = 's32[1]{0}', space=sflag, size = 0x4, scoped, tag = 'scoped memory for tpu_custom_call.1']
    #allocation5 [shape = 'u8[8192]{0}', space=vmem, size = 0x2000, scoped, tag = 'input window, operand 1, single buffered']
    #allocation6 [shape = 's32[1]{0}', space=sflag, size = 0x4, scoped, tag = 'scoped memory for tpu_custom_call.1']
    #allocation7 [shape = 'u8[8192]{0}', space=vmem, size = 0x2000, scoped, tag = 'input window, operand 2, single buffered']
    #allocation8 [shape = 'u8[32768]{0}', space=vmem, size = 0x8000, scoped, tag = 'input window, operand 3, single buffered']
    #allocation9 [shape = 's32[1]{0}', space=sflag, size = 0x4, scoped, tag = 'scoped memory for tpu_custom_call.1']
    #allocation10 [shape = 'u8[32768]{0}', space=vmem, size = 0x8000, scoped, tag = 'input window, operand 5, single buffered']
    #allocation11 [shape = 'u8[16384]{0}', space=vmem, size = 0x4000, scoped, tag = 'output window, operand 0, single buffered']
    %14 = vsyncpa [#allocation3], 0
    %15 = vsyncpa [#allocation6], 0
    %16 = vsyncpa [#allocation9], 0
    %17 = vsyncpa [#allocation4], 0
    // Predicated region
    $region2: #{tpu_custom_call.1} parent=1 // pred_check
      _
    $region3: #{tpu_custom_call.1} parent=1 // pred_check_branch
      %19 = sbr.rel (0) target = $region5
    $region4: #{tpu_custom_call.1} parent=1 // pred_region
      %s21 = ssub.s32 128, 128
      %22 = vsyncadd [#allocation3], %s21
      %s24 = sshll.u32 [#allocation2], 4
      %s25 = int_to_ptr.vmem [resolvable:$true] %s24
      %27 = dma.hbm_to_vmem [thread:$0]  %s0, 128, %s25, [#allocation3]
    $region5: #{tpu_custom_call.1} parent=1 // pred_fallthru
      _
    // Predicated region
    $region6: #{tpu_custom_call.1} parent=1 // pred_check
      _
    $region7: #{tpu_custom_call.1} parent=1 // pred_check_branch
      %29 = sbr.rel (0) target = $region9
    $region8: #{tpu_custom_call.1} parent=1 // pred_region
      %s31 = ssub.s32 256, 256
      %32 = vsyncadd [#allocation6], %s31
      %s33 = sshll.u32 [#allocation5], 4
      %s34 = int_to_ptr.vmem [resolvable:$true] %s33
      %39 = dma.hbm_to_vmem [thread:$0]  %s1, 256, %s34, [#allocation6], 128, 128, 8
    $region9: #{tpu_custom_call.1} parent=1 // pred_fallthru
      _
    // Predicated region
    $region10: #{tpu_custom_call.1} parent=1 // pred_check
      _
    $region11: #{tpu_custom_call.1} parent=1 // pred_check_branch
      %41 = sbr.rel (0) target = $region13
    $region12: #{tpu_custom_call.1} parent=1 // pred_region
      %s43 = ssub.s32 256, 256
      %44 = vsyncadd [#allocation6], %s43
      %s45 = sshll.u32 [#allocation7], 4
      %s46 = int_to_ptr.vmem [resolvable:$true] %s45
      %51 = dma.hbm_to_vmem [thread:$0]  %s2, 256, %s46, [#allocation6], 64, 64, 4
    $region13: #{tpu_custom_call.1} parent=1 // pred_fallthru
      _
    // Predicated region
    $region14: #{tpu_custom_call.1} parent=1 // pred_check
      _
    $region15: #{tpu_custom_call.1} parent=1 // pred_check_branch
      %53 = sbr.rel (0) target = $region17
    $region16: #{tpu_custom_call.1} parent=1 // pred_region
      %s55 = ssub.s32 1024, 1024
      %56 = vsyncadd [#allocation9], %s55
      %s57 = sshll.u32 [#allocation8], 4
      %s58 = int_to_ptr.vmem [resolvable:$true] %s57
      %63 = dma.hbm_to_vmem [thread:$0]  %s3, 1024, %s58, [#allocation9], 64, 64, 4
    $region17: #{tpu_custom_call.1} parent=1 // pred_fallthru
      _
    // Predicated region
    $region18: #{tpu_custom_call.1} parent=1 // pred_check
      _
    $region19: #{tpu_custom_call.1} parent=1 // pred_check_branch
      %65 = sbr.rel (0) target = $region21
    $region20: #{tpu_custom_call.1} parent=1 // pred_region
      _
    $region21: #{tpu_custom_call.1} parent=1 // pred_fallthru
      _
    // Predicated region
    $region22: #{tpu_custom_call.1} parent=1 // pred_check
      _
    $region23: #{tpu_custom_call.1} parent=1 // pred_check_branch
      %67 = sbr.rel (0) target = $region25
    $region24: #{tpu_custom_call.1} parent=1 // pred_region
      %s69 = ssub.s32 1024, 1024
      %70 = vsyncadd [#allocation9], %s69
      %s71 = sshll.u32 [#allocation10], 4
      %s72 = int_to_ptr.vmem [resolvable:$true] %s71
      %77 = dma.hbm_to_vmem [thread:$0]  %s5, 1024, %s72, [#allocation9], 64, 64, 4
    $region25: #{tpu_custom_call.1} parent=1 // pred_fallthru
      _
    // Predicated region
    $region26: #{tpu_custom_call.1} parent=1 // pred_check
      _
    $region27: #{tpu_custom_call.1} parent=1 // pred_check_branch
      %79 = sbr.rel (0) target = $region29
    $region28: #{tpu_custom_call.1} parent=1 // pred_region
      _
    $region29: #{tpu_custom_call.1} parent=1 // pred_fallthru
      _
    // Predicated region
    $region30: #{tpu_custom_call.1} parent=1 // pred_check
      _
    $region31: #{tpu_custom_call.1} parent=1 // pred_check_branch
      %81 = sbr.rel (0) target = $region33
    $region32: #{tpu_custom_call.1} parent=1 // pred_region
      %82 = dma.done [#allocation3], 128
    $region33: #{tpu_custom_call.1} parent=1 // pred_fallthru
      _
    // Predicated region
    $region34: #{tpu_custom_call.1} parent=1 // pred_check
      _
    $region35: #{tpu_custom_call.1} parent=1 // pred_check_branch
      %84 = sbr.rel (0) target = $region37
    $region36: #{tpu_custom_call.1} parent=1 // pred_region
      %85 = dma.done [#allocation6], 256
    $region37: #{tpu_custom_call.1} parent=1 // pred_fallthru
      _
    // Predicated region
    $region38: #{tpu_custom_call.1} parent=1 // pred_check
      _
    $region39: #{tpu_custom_call.1} parent=1 // pred_check_branch
      %87 = sbr.rel (0) target = $region41
    $region40: #{tpu_custom_call.1} parent=1 // pred_region
      %88 = dma.done [#allocation6], 256
    $region41: #{tpu_custom_call.1} parent=1 // pred_fallthru
      _
    // Predicated region
    $region42: #{tpu_custom_call.1} parent=1 // pred_check
      _
    $region43: #{tpu_custom_call.1} parent=1 // pred_check_branch
      %90 = sbr.rel (0) target = $region45
    $region44: #{tpu_custom_call.1} parent=1 // pred_region
      %91 = dma.done [#allocation9], 1024
    $region45: #{tpu_custom_call.1} parent=1 // pred_fallthru
      _
    // Predicated region
    $region46: #{tpu_custom_call.1} parent=1 // pred_check
      _
    $region47: #{tpu_custom_call.1} parent=1 // pred_check_branch
      %93 = sbr.rel (0) target = $region49
    $region48: #{tpu_custom_call.1} parent=1 // pred_region
      %94 = dma.done [#allocation9], 1024
    $region49: #{tpu_custom_call.1} parent=1 // pred_fallthru
      _
    %v96 = vld [vmem:[#allocation2] sm:$0xff]
    %v97 = vpack.c.bf16 %v96, %v96
    %v98 = vld [vmem:[#allocation7] sm:$0xf]
    %v99 = vld [vmem:[#allocation7 + $0x4] sm:$0xf]
    %v100 = vld [vmem:[#allocation7 + $0x8] sm:$0xf]
    %v101 = vld [vmem:[#allocation7 + $0xc] sm:$0xf]
    %v106 = vunpack.c.l.b16 %v98
    %v107 = vunpack.c.l.b16 %v99
    %v108 = vunpack.c.l.b16 %v100
    %v109 = vunpack.c.l.b16 %v101
    %v110 = vpack.c.b16 %v107, %v106
    %v111 = vpack.c.b16 %v109, %v108
    %vm114 = vcmask 261120
    %v116 = vsel %vm114, %v97, 0
    %118 = vmatprep.subr.bf16.mxu0 0
    %119 = vmatpush1.bf16.msra.mxu0 0
    %120 = vmatprep.subr.bf16.mxu0 0
    %121 = vmatpush1.bf16.msra.mxu0 0
    %122 = vmatprep.subr.bf16.mxu0 0
    %123 = vmatpush1.bf16.msra.mxu0 0
    %124 = vmatprep.subr.bf16.mxu0 0
    %125 = vmatpush1.bf16.msra.mxu0 0
    %126 = vmatprep.subr.bf16.mxu0 0
    %127 = vmatpush1.bf16.msra.mxu0 0
    %128 = vmatprep.subr.bf16.mxu0 0
    %129 = vmatpush1.bf16.msra.mxu0 0
    %130 = vmatprep.subr.bf16.mxu0 0
    %131 = vmatpush1.bf16.msra.mxu0 %v111
    %132 = vmatprep.subr.bf16.mxu0 0
    %133 = vmatpush1.bf16.msra.mxu0 %v110
    %134 = vmatprep.subr.bf16.mxu0 0
    %135 = vmatpush2.bf16.msra.mxu0 0
    %136 = vmatprep.subr.bf16.mxu0 0
    %137 = vmatpush2.bf16.msra.mxu0 0
    %138 = vmatprep.subr.bf16.mxu0 0
    %139 = vmatpush2.bf16.msra.mxu0 0
    %140 = vmatprep.subr.bf16.mxu0 0
    %141 = vmatpush2.bf16.msra.mxu0 0
    %142 = vmatprep.subr.bf16.mxu0 0
    %143 = vmatpush2.bf16.msra.mxu0 0
    %144 = vmatprep.subr.bf16.mxu0 0
    %145 = vmatpush2.bf16.msra.mxu0 0
    %146 = vmatprep.subr.bf16.mxu0 0
    %147 = vmatpush2.bf16.msra.mxu0 0
    %148 = vmatprep.subr.bf16.mxu0 0
    %149 = vmatpush2.bf16.msra.mxu0 0
    %150 = vmatprep.mubr.bf16.mxu0 0
    %151 = vmatmul.mubr.bf16.gmra.mxu0 %v116
    %v152 = vpop.f32.mrf.mxu0
    %v153 = vadd.f32 0.0, %v152
    %v154 = vpop.f32.mrf.mxu0
    %v155 = vpop.f32.mrf.mxu0
    %v156 = vpop.f32.mrf.mxu0
    %157 = vdwg.mxu0
    %v159 = vcombine.high %v153, %v153
    %v161 = vunpack.c.l.s4 1966171168
    %v162 = vunpack.c.0.s8 %v161
    %v163 = vlaneseq
    %v164 = vshrl.u32 %v163, 7
    %v165 = vsub.s32 %v162, %v164
    %v166 = vrot.slane %v153, %v165
    %v168 = vunpack.c.l.s4 1966171168
    %v169 = vunpack.c.0.s8 %v168
    %v170 = vlaneseq
    %v171 = vshrl.u32 %v170, 7
    %v172 = vsub.s32 %v169, %v171
    %v173 = vrot.slane %v159, %v172
    %v174 = vcombine.high %v166, %v166
    %v175 = vcombine.high %v173, %v173
    %v177 = vunpack.c.l.s4 1966171168
    %v178 = vunpack.c.0.s8 %v177
    %v179 = vlaneseq
    %v180 = vshrl.u32 %v179, 7
    %v181 = vsub.s32 %v178, %v180
    %v182 = vrot.slane %v166, %v181
    %v184 = vunpack.c.l.s4 1966171168
    %v185 = vunpack.c.0.s8 %v184
    %v186 = vlaneseq
    %v187 = vshrl.u32 %v186, 7
    %v188 = vsub.s32 %v185, %v187
    %v189 = vrot.slane %v173, %v188
    %v191 = vunpack.c.l.s4 1966171168
    %v192 = vunpack.c.0.s8 %v191
    %v193 = vlaneseq
    %v194 = vshrl.u32 %v193, 7
    %v195 = vsub.s32 %v192, %v194
    %v196 = vrot.slane %v174, %v195
    %v198 = vunpack.c.l.s4 1966171168
    %v199 = vunpack.c.0.s8 %v198
    %v200 = vlaneseq
    %v201 = vshrl.u32 %v200, 7
    %v202 = vsub.s32 %v199, %v201
    %v203 = vrot.slane %v175, %v202
    %v204 = vcombine.high %v182, %v182
    %v205 = vcombine.high %v189, %v189
    %v206 = vcombine.high %v196, %v196
    %v207 = vcombine.high %v203, %v203
    %v208 = vld [vmem:[#allocation5] sm:$0xff]
    %v209 = vld [vmem:[#allocation5 + $0x8] sm:$0xff]
    %v210 = vlaneseq
    %v211 = vshrl.u32 %v210, 7
    %v212 = vsub.s32 0, %v211
    %v213 = vrot.slane %v182, %v212
    %v214 = vlaneseq
    %v215 = vshrl.u32 %v214, 7
    %v216 = vsub.s32 0, %v215
    %v217 = vrot.slane %v196, %v216
    %v218 = vlaneseq
    %v219 = vshrl.u32 %v218, 7
    %v220 = vsub.s32 0, %v219
    %v221 = vrot.slane %v204, %v220
    %v222 = vlaneseq
    %v223 = vshrl.u32 %v222, 7
    %v224 = vsub.s32 0, %v223
    %v225 = vrot.slane %v206, %v224
    %v226 = vlaneseq
    %v227 = vshrl.u32 %v226, 7
    %v228 = vsub.s32 0, %v227
    %v229 = vrot.slane %v189, %v228
    %v230 = vlaneseq
    %v231 = vshrl.u32 %v230, 7
    %v232 = vsub.s32 0, %v231
    %v233 = vrot.slane %v203, %v232
    %v234 = vlaneseq
    %v235 = vshrl.u32 %v234, 7
    %v236 = vsub.s32 0, %v235
    %v237 = vrot.slane %v205, %v236
    %v238 = vlaneseq
    %v239 = vshrl.u32 %v238, 7
    %v240 = vsub.s32 0, %v239
    %v241 = vrot.slane %v207, %v240
    %v250 = vadd.f32 %v213, %v208
    %v251 = vadd.f32 %v213, %v209
    %v252 = vadd.f32 %v217, %v208
    %v253 = vadd.f32 %v217, %v209
    %v254 = vadd.f32 %v221, %v208
    %v255 = vadd.f32 %v221, %v209
    %v256 = vadd.f32 %v225, %v208
    %v257 = vadd.f32 %v225, %v209
    %v258 = vadd.f32 %v229, %v208
    %v259 = vadd.f32 %v229, %v209
    %v260 = vadd.f32 %v233, %v208
    %v261 = vadd.f32 %v233, %v209
    %v262 = vadd.f32 %v237, %v208
    %v263 = vadd.f32 %v237, %v209
    %v264 = vadd.f32 %v241, %v208
    %v265 = vadd.f32 %v241, %v209
    %v266 = vmax.f32 %v250, 0.0
    %v267 = vmax.f32 %v251, 0.0
    %v268 = vmax.f32 %v252, 0.0
    %v269 = vmax.f32 %v253, 0.0
    %v270 = vmax.f32 %v254, 0.0
    %v271 = vmax.f32 %v255, 0.0
    %v272 = vmax.f32 %v256, 0.0
    %v273 = vmax.f32 %v257, 0.0
    %v274 = vmax.f32 %v258, 0.0
    %v275 = vmax.f32 %v259, 0.0
    %v276 = vmax.f32 %v260, 0.0
    %v277 = vmax.f32 %v261, 0.0
    %v278 = vmax.f32 %v262, 0.0
    %v279 = vmax.f32 %v263, 0.0
    %v280 = vmax.f32 %v264, 0.0
    %v281 = vmax.f32 %v265, 0.0
    %v282 = vpack.c.bf16 %v267, %v266
    %v283 = vpack.c.bf16 %v269, %v268
    %v284 = vpack.c.bf16 %v271, %v270
    %v285 = vpack.c.bf16 %v273, %v272
    %v286 = vpack.c.bf16 %v275, %v274
    %v287 = vpack.c.bf16 %v277, %v276
    %v288 = vpack.c.bf16 %v279, %v278
    %v289 = vpack.c.bf16 %v281, %v280
    %v290 = vld [vmem:[#allocation8] sm:$0xf]
    %v291 = vld [vmem:[#allocation8 + $0x4] sm:$0xf]
    %v292 = vld [vmem:[#allocation8 + $0x8] sm:$0xf]
    %v293 = vld [vmem:[#allocation8 + $0xc] sm:$0xf]
    %v294 = vld [vmem:[#allocation8 + $0x10] sm:$0xf]
    %v295 = vld [vmem:[#allocation8 + $0x14] sm:$0xf]
    %v296 = vld [vmem:[#allocation8 + $0x18] sm:$0xf]
    %v297 = vld [vmem:[#allocation8 + $0x1c] sm:$0xf]
    %v298 = vld [vmem:[#allocation8 + $0x20] sm:$0xf]
    %v299 = vld [vmem:[#allocation8 + $0x24] sm:$0xf]
    %v300 = vld [vmem:[#allocation8 + $0x28] sm:$0xf]
    %v301 = vld [vmem:[#allocation8 + $0x2c] sm:$0xf]
    %v302 = vld [vmem:[#allocation8 + $0x30] sm:$0xf]
    %v303 = vld [vmem:[#allocation8 + $0x34] sm:$0xf]
    %v304 = vld [vmem:[#allocation8 + $0x38] sm:$0xf]
    %v305 = vld [vmem:[#allocation8 + $0x3c] sm:$0xf]
    %v306 = vld [vmem:[%s4] sm:$0x1]
    %v308 = vlaneseq
    %v309 = vshrl.u32 %v308, 7
    %v310 = vsub.s32 0, %v309
    %v311 = vrot.slane %v306, %v310
    %v329 = vunpack.c.l.b16 %v290
    %v330 = vunpack.c.l.b16 %v291
    %v331 = vunpack.c.l.b16 %v292
    %v332 = vunpack.c.l.b16 %v293
    %v333 = vunpack.c.l.b16 %v294
    %v334 = vunpack.c.l.b16 %v295
    %v335 = vunpack.c.l.b16 %v296
    %v336 = vunpack.c.l.b16 %v297
    %v337 = vunpack.c.l.b16 %v298
    %v338 = vunpack.c.l.b16 %v299
    %v339 = vunpack.c.l.b16 %v300
    %v340 = vunpack.c.l.b16 %v301
    %v341 = vunpack.c.l.b16 %v302
    %v342 = vunpack.c.l.b16 %v303
    %v343 = vunpack.c.l.b16 %v304
    %v344 = vunpack.c.l.b16 %v305
    %v345 = vpack.c.b16 %v330, %v329
    %v346 = vpack.c.b16 %v332, %v331
    %v347 = vpack.c.b16 %v334, %v333
    %v348 = vpack.c.b16 %v336, %v335
    %v349 = vpack.c.b16 %v338, %v337
    %v350 = vpack.c.b16 %v340, %v339
    %v351 = vpack.c.b16 %v342, %v341
    %v352 = vpack.c.b16 %v344, %v343
    %361 = vmatprep.subr.bf16.mxu0 0
    %362 = vmatpush1.bf16.msra.mxu0 %v352
    %363 = vmatprep.subr.bf16.mxu0 0
    %364 = vmatpush1.bf16.msra.mxu0 %v351
    %365 = vmatprep.subr.bf16.mxu0 0
    %366 = vmatpush1.bf16.msra.mxu0 %v350
    %367 = vmatprep.subr.bf16.mxu0 0
    %368 = vmatpush1.bf16.msra.mxu0 %v349
    %369 = vmatprep.subr.bf16.mxu0 0
    %370 = vmatpush1.bf16.msra.mxu0 %v348
    %371 = vmatprep.subr.bf16.mxu0 0
    %372 = vmatpush1.bf16.msra.mxu0 %v347
    %373 = vmatprep.subr.bf16.mxu0 0
    %374 = vmatpush1.bf16.msra.mxu0 %v346
    %375 = vmatprep.subr.bf16.mxu0 0
    %376 = vmatpush1.bf16.msra.mxu0 %v345
    %377 = vmatprep.subr.bf16.mxu0 0
    %378 = vmatpush2.bf16.msra.mxu0 0
    %379 = vmatprep.subr.bf16.mxu0 0
    %380 = vmatpush2.bf16.msra.mxu0 0
    %381 = vmatprep.subr.bf16.mxu0 0
    %382 = vmatpush2.bf16.msra.mxu0 0
    %383 = vmatprep.subr.bf16.mxu0 0
    %384 = vmatpush2.bf16.msra.mxu0 0
    %385 = vmatprep.subr.bf16.mxu0 0
    %386 = vmatpush2.bf16.msra.mxu0 0
    %387 = vmatprep.subr.bf16.mxu0 0
    %388 = vmatpush2.bf16.msra.mxu0 0
    %389 = vmatprep.subr.bf16.mxu0 0
    %390 = vmatpush2.bf16.msra.mxu0 0
    %391 = vmatprep.subr.bf16.mxu0 0
    %392 = vmatpush2.bf16.msra.mxu0 0
    %393 = vmatprep.mubr.bf16.mxu0 0
    %394 = vmatmul.mubr.bf16.gmra.mxu0 %v282
    %v395 = vpop.f32.mrf.mxu0
    %v396 = vadd.f32 %v311, %v395
    %v397 = vpop.f32.mrf.mxu0
    %v398 = vpop.f32.mrf.mxu0
    %v399 = vadd.f32 %v311, %v398
    %v400 = vpop.f32.mrf.mxu0
    %401 = vmatprep.mubr.bf16.mxu0 0
    %402 = vmatmul.mubr.bf16.gmra.mxu0 %v283
    %v403 = vpop.f32.mrf.mxu0
    %v404 = vadd.f32 %v311, %v403
    %v405 = vpop.f32.mrf.mxu0
    %v406 = vpop.f32.mrf.mxu0
    %v407 = vadd.f32 %v311, %v406
    %v408 = vpop.f32.mrf.mxu0
    %409 = vmatprep.mubr.bf16.mxu0 0
    %410 = vmatmul.mubr.bf16.gmra.mxu0 %v284
    %v411 = vpop.f32.mrf.mxu0
    %v412 = vadd.f32 %v311, %v411
    %v413 = vpop.f32.mrf.mxu0
    %v414 = vpop.f32.mrf.mxu0
    %v415 = vadd.f32 %v311, %v414
    %v416 = vpop.f32.mrf.mxu0
    %417 = vmatprep.mubr.bf16.mxu0 0
    %418 = vmatmul.mubr.bf16.gmra.mxu0 %v285
    %v419 = vpop.f32.mrf.mxu0
    %v420 = vadd.f32 %v311, %v419
    %v421 = vpop.f32.mrf.mxu0
    %v422 = vpop.f32.mrf.mxu0
    %v423 = vadd.f32 %v311, %v422
    %v424 = vpop.f32.mrf.mxu0
    %425 = vmatprep.mubr.bf16.mxu0 0
    %426 = vmatmul.mubr.bf16.gmra.mxu0 %v286
    %v427 = vpop.f32.mrf.mxu0
    %v428 = vadd.f32 %v311, %v427
    %v429 = vpop.f32.mrf.mxu0
    %v430 = vpop.f32.mrf.mxu0
    %v431 = vadd.f32 %v311, %v430
    %v432 = vpop.f32.mrf.mxu0
    %433 = vmatprep.mubr.bf16.mxu0 0
    %434 = vmatmul.mubr.bf16.gmra.mxu0 %v287
    %v435 = vpop.f32.mrf.mxu0
    %v436 = vadd.f32 %v311, %v435
    %v437 = vpop.f32.mrf.mxu0
    %v438 = vpop.f32.mrf.mxu0
    %v439 = vadd.f32 %v311, %v438
    %v440 = vpop.f32.mrf.mxu0
    %441 = vmatprep.mubr.bf16.mxu0 0
    %442 = vmatmul.mubr.bf16.gmra.mxu0 %v288
    %v443 = vpop.f32.mrf.mxu0
    %v444 = vadd.f32 %v311, %v443
    %v445 = vpop.f32.mrf.mxu0
    %v446 = vpop.f32.mrf.mxu0
    %v447 = vadd.f32 %v311, %v446
    %v448 = vpop.f32.mrf.mxu0
    %449 = vmatprep.mubr.bf16.mxu0 0
    %450 = vmatmul.mubr.bf16.gmra.mxu0 %v289
    %v451 = vpop.f32.mrf.mxu0
    %v452 = vadd.f32 %v311, %v451
    %v453 = vpop.f32.mrf.mxu0
    %v454 = vpop.f32.mrf.mxu0
    %v455 = vadd.f32 %v311, %v454
    %v456 = vpop.f32.mrf.mxu0
    %457 = vdwg.mxu0
    %v458 = vmax.f32 %v396, 0.0
    %v459 = vmax.f32 %v399, 0.0
    %v460 = vmax.f32 %v404, 0.0
    %v461 = vmax.f32 %v407, 0.0
    %v462 = vmax.f32 %v412, 0.0
    %v463 = vmax.f32 %v415, 0.0
    %v464 = vmax.f32 %v420, 0.0
    %v465 = vmax.f32 %v423, 0.0
    %v466 = vmax.f32 %v428, 0.0
    %v467 = vmax.f32 %v431, 0.0
    %v468 = vmax.f32 %v436, 0.0
    %v469 = vmax.f32 %v439, 0.0
    %v470 = vmax.f32 %v444, 0.0
    %v471 = vmax.f32 %v447, 0.0
    %v472 = vmax.f32 %v452, 0.0
    %v473 = vmax.f32 %v455, 0.0
    %v474 = vpack.c.bf16 %v459, %v458
    %v475 = vpack.c.bf16 %v461, %v460
    %v476 = vpack.c.bf16 %v463, %v462
    %v477 = vpack.c.bf16 %v465, %v464
    %v478 = vpack.c.bf16 %v467, %v466
    %v479 = vpack.c.bf16 %v469, %v468
    %v480 = vpack.c.bf16 %v471, %v470
    %v481 = vpack.c.bf16 %v473, %v472
    %v482 = vld [vmem:[#allocation10] sm:$0xf]
    %v483 = vld [vmem:[#allocation10 + $0x4] sm:$0xf]
    %v484 = vld [vmem:[#allocation10 + $0x8] sm:$0xf]
    %v485 = vld [vmem:[#allocation10 + $0xc] sm:$0xf]
    %v486 = vld [vmem:[#allocation10 + $0x10] sm:$0xf]
    %v487 = vld [vmem:[#allocation10 + $0x14] sm:$0xf]
    %v488 = vld [vmem:[#allocation10 + $0x18] sm:$0xf]
    %v489 = vld [vmem:[#allocation10 + $0x1c] sm:$0xf]
    %v490 = vld [vmem:[#allocation10 + $0x20] sm:$0xf]
    %v491 = vld [vmem:[#allocation10 + $0x24] sm:$0xf]
    %v492 = vld [vmem:[#allocation10 + $0x28] sm:$0xf]
    %v493 = vld [vmem:[#allocation10 + $0x2c] sm:$0xf]
    %v494 = vld [vmem:[#allocation10 + $0x30] sm:$0xf]
    %v495 = vld [vmem:[#allocation10 + $0x34] sm:$0xf]
    %v496 = vld [vmem:[#allocation10 + $0x38] sm:$0xf]
    %v497 = vld [vmem:[#allocation10 + $0x3c] sm:$0xf]
    %v498 = vld [vmem:[%s6] sm:$0x1]
    %v500 = vlaneseq
    %v501 = vshrl.u32 %v500, 7
    %v502 = vsub.s32 0, %v501
    %v503 = vrot.slane %v498, %v502
    %v521 = vunpack.c.l.b16 %v482
    %v522 = vunpack.c.l.b16 %v483
    %v523 = vunpack.c.l.b16 %v484
    %v524 = vunpack.c.l.b16 %v485
    %v525 = vunpack.c.l.b16 %v486
    %v526 = vunpack.c.l.b16 %v487
    %v527 = vunpack.c.l.b16 %v488
    %v528 = vunpack.c.l.b16 %v489
    %v529 = vunpack.c.l.b16 %v490
    %v530 = vunpack.c.l.b16 %v491
    %v531 = vunpack.c.l.b16 %v492
    %v532 = vunpack.c.l.b16 %v493
    %v533 = vunpack.c.l.b16 %v494
    %v534 = vunpack.c.l.b16 %v495
    %v535 = vunpack.c.l.b16 %v496
    %v536 = vunpack.c.l.b16 %v497
    %v537 = vpack.c.b16 %v522, %v521
    %v538 = vpack.c.b16 %v524, %v523
    %v539 = vpack.c.b16 %v526, %v525
    %v540 = vpack.c.b16 %v528, %v527
    %v541 = vpack.c.b16 %v530, %v529
    %v542 = vpack.c.b16 %v532, %v531
    %v543 = vpack.c.b16 %v534, %v533
    %v544 = vpack.c.b16 %v536, %v535
    %553 = vmatprep.subr.bf16.mxu0 0
    %554 = vmatpush1.bf16.msra.mxu0 %v544
    %555 = vmatprep.subr.bf16.mxu0 0
    %556 = vmatpush1.bf16.msra.mxu0 %v543
    %557 = vmatprep.subr.bf16.mxu0 0
    %558 = vmatpush1.bf16.msra.mxu0 %v542
    %559 = vmatprep.subr.bf16.mxu0 0
    %560 = vmatpush1.bf16.msra.mxu0 %v541
    %561 = vmatprep.subr.bf16.mxu0 0
    %562 = vmatpush1.bf16.msra.mxu0 %v540
    %563 = vmatprep.subr.bf16.mxu0 0
    %564 = vmatpush1.bf16.msra.mxu0 %v539
    %565 = vmatprep.subr.bf16.mxu0 0
    %566 = vmatpush1.bf16.msra.mxu0 %v538
    %567 = vmatprep.subr.bf16.mxu0 0
    %568 = vmatpush1.bf16.msra.mxu0 %v537
    %569 = vmatprep.subr.bf16.mxu0 0
    %570 = vmatpush2.bf16.msra.mxu0 0
    %571 = vmatprep.subr.bf16.mxu0 0
    %572 = vmatpush2.bf16.msra.mxu0 0
    %573 = vmatprep.subr.bf16.mxu0 0
    %574 = vmatpush2.bf16.msra.mxu0 0
    %575 = vmatprep.subr.bf16.mxu0 0
    %576 = vmatpush2.bf16.msra.mxu0 0
    %577 = vmatprep.subr.bf16.mxu0 0
    %578 = vmatpush2.bf16.msra.mxu0 0
    %579 = vmatprep.subr.bf16.mxu0 0
    %580 = vmatpush2.bf16.msra.mxu0 0
    %581 = vmatprep.subr.bf16.mxu0 0
    %582 = vmatpush2.bf16.msra.mxu0 0
    %583 = vmatprep.subr.bf16.mxu0 0
    %584 = vmatpush2.bf16.msra.mxu0 0
    %585 = vmatprep.mubr.bf16.mxu0 0
    %586 = vmatmul.mubr.bf16.gmra.mxu0 %v474
    %v587 = vpop.f32.mrf.mxu0
    %v588 = vadd.f32 %v503, %v587
    %v589 = vpop.f32.mrf.mxu0
    %v590 = vpop.f32.mrf.mxu0
    %v591 = vadd.f32 %v503, %v590
    %v592 = vpop.f32.mrf.mxu0
    %593 = vmatprep.mubr.bf16.mxu0 0
    %594 = vmatmul.mubr.bf16.gmra.mxu0 %v475
    %v595 = vpop.f32.mrf.mxu0
    %v596 = vadd.f32 %v503, %v595
    %v597 = vpop.f32.mrf.mxu0
    %v598 = vpop.f32.mrf.mxu0
    %v599 = vadd.f32 %v503, %v598
    %v600 = vpop.f32.mrf.mxu0
    %601 = vmatprep.mubr.bf16.mxu0 0
    %602 = vmatmul.mubr.bf16.gmra.mxu0 %v476
    %v603 = vpop.f32.mrf.mxu0
    %v604 = vadd.f32 %v503, %v603
    %v605 = vpop.f32.mrf.mxu0
    %v606 = vpop.f32.mrf.mxu0
    %v607 = vadd.f32 %v503, %v606
    %v608 = vpop.f32.mrf.mxu0
    %609 = vmatprep.mubr.bf16.mxu0 0
    %610 = vmatmul.mubr.bf16.gmra.mxu0 %v477
    %v611 = vpop.f32.mrf.mxu0
    %v612 = vadd.f32 %v503, %v611
    %v613 = vpop.f32.mrf.mxu0
    %v614 = vpop.f32.mrf.mxu0
    %v615 = vadd.f32 %v503, %v614
    %v616 = vpop.f32.mrf.mxu0
    %617 = vmatprep.mubr.bf16.mxu0 0
    %618 = vmatmul.mubr.bf16.gmra.mxu0 %v478
    %v619 = vpop.f32.mrf.mxu0
    %v620 = vadd.f32 %v503, %v619
    %v621 = vpop.f32.mrf.mxu0
    %v622 = vpop.f32.mrf.mxu0
    %v623 = vadd.f32 %v503, %v622
    %v624 = vpop.f32.mrf.mxu0
    %625 = vmatprep.mubr.bf16.mxu0 0
    %626 = vmatmul.mubr.bf16.gmra.mxu0 %v479
    %v627 = vpop.f32.mrf.mxu0
    %v628 = vadd.f32 %v503, %v627
    %v629 = vpop.f32.mrf.mxu0
    %v630 = vpop.f32.mrf.mxu0
    %v631 = vadd.f32 %v503, %v630
    %v632 = vpop.f32.mrf.mxu0
    %633 = vmatprep.mubr.bf16.mxu0 0
    %634 = vmatmul.mubr.bf16.gmra.mxu0 %v480
    %v635 = vpop.f32.mrf.mxu0
    %v636 = vadd.f32 %v503, %v635
    %v637 = vpop.f32.mrf.mxu0
    %v638 = vpop.f32.mrf.mxu0
    %v639 = vadd.f32 %v503, %v638
    %v640 = vpop.f32.mrf.mxu0
    %641 = vmatprep.mubr.bf16.mxu0 0
    %642 = vmatmul.mubr.bf16.gmra.mxu0 %v481
    %v643 = vpop.f32.mrf.mxu0
    %v644 = vadd.f32 %v503, %v643
    %v645 = vpop.f32.mrf.mxu0
    %v646 = vpop.f32.mrf.mxu0
    %v647 = vadd.f32 %v503, %v646
    %v648 = vpop.f32.mrf.mxu0
    %649 = vdwg.mxu0
    %vm650 = vcmask 269568
    %v651 = vsel %vm650, %v588, -inf
    %v652 = vsel %vm650, %v596, -inf
    %v653 = vmax.f32 %v651, %v652
    %v654 = vsel %vm650, %v604, -inf
    %v655 = vmax.f32 %v653, %v654
    %v656 = vsel %vm650, %v612, -inf
    %v657 = vmax.f32 %v655, %v656
    %v658 = vsel %vm650, %v591, -inf
    %v659 = vsel %vm650, %v599, -inf
    %v660 = vmax.f32 %v658, %v659
    %v661 = vsel %vm650, %v607, -inf
    %v662 = vmax.f32 %v660, %v661
    %v663 = vsel %vm650, %v615, -inf
    %v664 = vmax.f32 %v662, %v663
    %v665 = vsel %vm650, %v620, -inf
    %v666 = vsel %vm650, %v628, -inf
    %v667 = vmax.f32 %v665, %v666
    %v668 = vsel %vm650, %v636, -inf
    %v669 = vmax.f32 %v667, %v668
    %v670 = vsel %vm650, %v644, -inf
    %v671 = vmax.f32 %v669, %v670
    %v672 = vsel %vm650, %v623, -inf
    %v673 = vsel %vm650, %v631, -inf
    %v674 = vmax.f32 %v672, %v673
    %v675 = vsel %vm650, %v639, -inf
    %v676 = vmax.f32 %v674, %v675
    %v677 = vsel %vm650, %v647, -inf
    %v678 = vmax.f32 %v676, %v677
    %v679 = vsub.f32 %v588, %v657
    %v680 = vsub.f32 %v591, %v664
    %v681 = vsub.f32 %v596, %v657
    %v682 = vsub.f32 %v599, %v664
    %v683 = vsub.f32 %v604, %v657
    %v684 = vsub.f32 %v607, %v664
    %v685 = vsub.f32 %v612, %v657
    %v686 = vsub.f32 %v615, %v664
    %v687 = vsub.f32 %v620, %v671
    %v688 = vsub.f32 %v623, %v678
    %v689 = vsub.f32 %v628, %v671
    %v690 = vsub.f32 %v631, %v678
    %v691 = vsub.f32 %v636, %v671
    %v692 = vsub.f32 %v639, %v678
    %v693 = vsub.f32 %v644, %v671
    %v694 = vsub.f32 %v647, %v678
    %v695 = vmul.f32 %v679, 1.442695
    %v696 = vpow.pop %v695
    %v697 = vmul.f32 %v680, 1.442695
    %v698 = vpow.pop %v697
    %v699 = vmul.f32 %v681, 1.442695
    %v700 = vpow.pop %v699
    %v701 = vmul.f32 %v682, 1.442695
    %v702 = vpow.pop %v701
    %v703 = vmul.f32 %v683, 1.442695
    %v704 = vpow.pop %v703
    %v705 = vmul.f32 %v684, 1.442695
    %v706 = vpow.pop %v705
    %v707 = vmul.f32 %v685, 1.442695
    %v708 = vpow.pop %v707
    %v709 = vmul.f32 %v686, 1.442695
    %v710 = vpow.pop %v709
    %v711 = vmul.f32 %v687, 1.442695
    %v712 = vpow.pop %v711
    %v713 = vmul.f32 %v688, 1.442695
    %v714 = vpow.pop %v713
    %v715 = vmul.f32 %v689, 1.442695
    %v716 = vpow.pop %v715
    %v717 = vmul.f32 %v690, 1.442695
    %v718 = vpow.pop %v717
    %v719 = vmul.f32 %v691, 1.442695
    %v720 = vpow.pop %v719
    %v721 = vmul.f32 %v692, 1.442695
    %v722 = vpow.pop %v721
    %v723 = vmul.f32 %v693, 1.442695
    %v724 = vpow.pop %v723
    %v725 = vmul.f32 %v694, 1.442695
    %v726 = vpow.pop %v725
    %v727 = vsel %vm650, %v696, 0.0
    %v728 = vsel %vm650, %v700, 0.0
    %v729 = vadd.f32 %v727, %v728
    %v730 = vsel %vm650, %v704, 0.0
    %v731 = vadd.f32 %v729, %v730
    %v732 = vsel %vm650, %v708, 0.0
    %v733 = vadd.f32 %v731, %v732
    %v734 = vsel %vm650, %v698, 0.0
    %v735 = vsel %vm650, %v702, 0.0
    %v736 = vadd.f32 %v734, %v735
    %v737 = vsel %vm650, %v706, 0.0
    %v738 = vadd.f32 %v736, %v737
    %v739 = vsel %vm650, %v710, 0.0
    %v740 = vadd.f32 %v738, %v739
    %v741 = vsel %vm650, %v712, 0.0
    %v742 = vsel %vm650, %v716, 0.0
    %v743 = vadd.f32 %v741, %v742
    %v744 = vsel %vm650, %v720, 0.0
    %v745 = vadd.f32 %v743, %v744
    %v746 = vsel %vm650, %v724, 0.0
    %v747 = vadd.f32 %v745, %v746
    %v748 = vsel %vm650, %v714, 0.0
    %v749 = vsel %vm650, %v718, 0.0
    %v750 = vadd.f32 %v748, %v749
    %v751 = vsel %vm650, %v722, 0.0
    %v752 = vadd.f32 %v750, %v751
    %v753 = vsel %vm650, %v726, 0.0
    %v754 = vadd.f32 %v752, %v753
    %v755 = vrcp.pop %v733
    %v756 = vrcp.pop %v740
    %v757 = vrcp.pop %v747
    %v758 = vrcp.pop %v754
    %v759 = vmul.f32 %v696, %v755
    %v760 = vmul.f32 %v698, %v756
    %v761 = vmul.f32 %v700, %v755
    %v762 = vmul.f32 %v702, %v756
    %v763 = vmul.f32 %v704, %v755
    %v764 = vmul.f32 %v706, %v756
    %v765 = vmul.f32 %v708, %v755
    %v766 = vmul.f32 %v710, %v756
    %v767 = vmul.f32 %v712, %v757
    %v768 = vmul.f32 %v714, %v758
    %v769 = vmul.f32 %v716, %v757
    %v770 = vmul.f32 %v718, %v758
    %v771 = vmul.f32 %v720, %v757
    %v772 = vmul.f32 %v722, %v758
    %v773 = vmul.f32 %v724, %v757
    %v774 = vmul.f32 %v726, %v758
    %776 = vset.pattern.permute.xlu0 32
    %777 = vperm.xlu0 %776, %v759
    %v778 = vpop.permute.xlu0 %777
    %781 = vset.pattern.permute.xlu0 32
    %782 = vperm.xlu0 %781, %v760
    %v783 = vpop.permute.xlu0 %782
    %786 = vset.pattern.permute.xlu0 32
    %787 = vperm.xlu0 %786, %v761
    %v788 = vpop.permute.xlu0 %787
    %791 = vset.pattern.permute.xlu0 32
    %792 = vperm.xlu0 %791, %v762
    %v793 = vpop.permute.xlu0 %792
    %796 = vset.pattern.permute.xlu0 32
    %797 = vperm.xlu0 %796, %v763
    %v798 = vpop.permute.xlu0 %797
    %801 = vset.pattern.permute.xlu0 32
    %802 = vperm.xlu0 %801, %v764
    %v803 = vpop.permute.xlu0 %802
    %806 = vset.pattern.permute.xlu0 32
    %807 = vperm.xlu0 %806, %v765
    %v808 = vpop.permute.xlu0 %807
    %811 = vset.pattern.permute.xlu0 32
    %812 = vperm.xlu0 %811, %v766
    %v813 = vpop.permute.xlu0 %812
    %816 = vset.pattern.permute.xlu0 32
    %817 = vperm.xlu0 %816, %v767
    %v818 = vpop.permute.xlu0 %817
    %821 = vset.pattern.permute.xlu0 32
    %822 = vperm.xlu0 %821, %v768
    %v823 = vpop.permute.xlu0 %822
    %826 = vset.pattern.permute.xlu0 32
    %827 = vperm.xlu0 %826, %v769
    %v828 = vpop.permute.xlu0 %827
    %831 = vset.pattern.permute.xlu0 32
    %832 = vperm.xlu0 %831, %v770
    %v833 = vpop.permute.xlu0 %832
    %836 = vset.pattern.permute.xlu0 32
    %837 = vperm.xlu0 %836, %v771
    %v838 = vpop.permute.xlu0 %837
    %841 = vset.pattern.permute.xlu0 32
    %842 = vperm.xlu0 %841, %v772
    %v843 = vpop.permute.xlu0 %842
    %846 = vset.pattern.permute.xlu0 32
    %847 = vperm.xlu0 %846, %v773
    %v848 = vpop.permute.xlu0 %847
    %851 = vset.pattern.permute.xlu0 32
    %852 = vperm.xlu0 %851, %v774
    %v853 = vpop.permute.xlu0 %852
    %v855 = vmul.f32 %v588, %v778
    %v856 = vmul.f32 %v591, %v783
    %v857 = vmul.f32 %v596, %v788
    %v858 = vmul.f32 %v599, %v793
    %v859 = vmul.f32 %v604, %v798
    %v860 = vmul.f32 %v607, %v803
    %v861 = vmul.f32 %v612, %v808
    %v862 = vmul.f32 %v615, %v813
    %v863 = vmul.f32 %v620, %v818
    %v864 = vmul.f32 %v623, %v823
    %v865 = vmul.f32 %v628, %v828
    %v866 = vmul.f32 %v631, %v833
    %v867 = vmul.f32 %v636, %v838
    %v868 = vmul.f32 %v639, %v843
    %v869 = vmul.f32 %v644, %v848
    %v870 = vmul.f32 %v647, %v853
    %v871 = vadd.f32 %v855, %v857
    %v872 = vadd.f32 %v871, %v859
    %v873 = vadd.f32 %v872, %v861
    %v874 = vadd.f32 %v856, %v858
    %v875 = vadd.f32 %v874, %v860
    %v876 = vadd.f32 %v875, %v862
    %v877 = vadd.f32 %v863, %v865
    %v878 = vadd.f32 %v877, %v867
    %v879 = vadd.f32 %v878, %v869
    %v880 = vadd.f32 %v864, %v866
    %v881 = vadd.f32 %v880, %v868
    %v882 = vadd.f32 %v881, %v870
    %883 = vst [vmem:[#allocation11] sm:$0xff] %v873
    %884 = vst [vmem:[#allocation11 + $0x8] sm:$0xff] %v876
    %885 = vst [vmem:[#allocation11 + $0x10] sm:$0xff] %v879
    %886 = vst [vmem:[#allocation11 + $0x18] sm:$0xff] %v882
    %887 = vrot.lane.b32.xlu0 %v759, 96
    %v888 = vpop.permute.xlu0 %887
    %889 = vrot.lane.b32.xlu0 %v760, 96
    %v890 = vpop.permute.xlu0 %889
    %891 = vrot.lane.b32.xlu0 %v761, 96
    %v892 = vpop.permute.xlu0 %891
    %893 = vrot.lane.b32.xlu0 %v762, 96
    %v894 = vpop.permute.xlu0 %893
    %895 = vrot.lane.b32.xlu0 %v763, 96
    %v896 = vpop.permute.xlu0 %895
    %897 = vrot.lane.b32.xlu0 %v764, 96
    %v898 = vpop.permute.xlu0 %897
    %899 = vrot.lane.b32.xlu0 %v765, 96
    %v900 = vpop.permute.xlu0 %899
    %901 = vrot.lane.b32.xlu0 %v766, 96
    %v902 = vpop.permute.xlu0 %901
    %903 = vrot.lane.b32.xlu0 %v767, 96
    %v904 = vpop.permute.xlu0 %903
    %905 = vrot.lane.b32.xlu0 %v768, 96
    %v906 = vpop.permute.xlu0 %905
    %907 = vrot.lane.b32.xlu0 %v769, 96
    %v908 = vpop.permute.xlu0 %907
    %909 = vrot.lane.b32.xlu0 %v770, 96
    %v910 = vpop.permute.xlu0 %909
    %911 = vrot.lane.b32.xlu0 %v771, 96
    %v912 = vpop.permute.xlu0 %911
    %913 = vrot.lane.b32.xlu0 %v772, 96
    %v914 = vpop.permute.xlu0 %913
    %915 = vrot.lane.b32.xlu0 %v773, 96
    %v916 = vpop.permute.xlu0 %915
    %917 = vrot.lane.b32.xlu0 %v774, 96
    %v918 = vpop.permute.xlu0 %917
    %vm935 = vcmask 7168
    %936 = vst.msk [vmem:[%s8] sm:$0xff] %vm935, %v888
    %937 = vst.msk [vmem:[%s8 + $0x8] sm:$0xff] %vm935, %v890
    %938 = vst.msk [vmem:[%s8 + $0x10] sm:$0xff] %vm935, %v892
    %939 = vst.msk [vmem:[%s8 + $0x18] sm:$0xff] %vm935, %v894
    %940 = vst.msk [vmem:[%s8 + $0x20] sm:$0xff] %vm935, %v896
    %941 = vst.msk [vmem:[%s8 + $0x28] sm:$0xff] %vm935, %v898
    %942 = vst.msk [vmem:[%s8 + $0x30] sm:$0xff] %vm935, %v900
    %943 = vst.msk [vmem:[%s8 + $0x38] sm:$0xff] %vm935, %v902
    %944 = vst.msk [vmem:[%s8 + $0x40] sm:$0xff] %vm935, %v904
    %945 = vst.msk [vmem:[%s8 + $0x48] sm:$0xff] %vm935, %v906
    %946 = vst.msk [vmem:[%s8 + $0x50] sm:$0xff] %vm935, %v908
    %947 = vst.msk [vmem:[%s8 + $0x58] sm:$0xff] %vm935, %v910
    %948 = vst.msk [vmem:[%s8 + $0x60] sm:$0xff] %vm935, %v912
    %949 = vst.msk [vmem:[%s8 + $0x68] sm:$0xff] %vm935, %v914
    %950 = vst.msk [vmem:[%s8 + $0x70] sm:$0xff] %vm935, %v916
    %951 = vst.msk [vmem:[%s8 + $0x78] sm:$0xff] %vm935, %v918
    // Predicated region
    $region50: #{tpu_custom_call.1} parent=1 // pred_check
      _
    $region51: #{tpu_custom_call.1} parent=1 // pred_check_branch
      %953 = sbr.rel (0) target = $region53
    $region52: #{tpu_custom_call.1} parent=1 // pred_region
      %s955 = ssub.s32 512, 512
      %956 = vsyncadd [#allocation4], %s955
      %s957 = sshll.u32 [#allocation11], 4
      %s958 = int_to_ptr.vmem [resolvable:$true] %s957
      %963 = dma.vmem_to_hbm [thread:$0]  %s958, 512, %s7, [#allocation4], 128, 128, 8
    $region53: #{tpu_custom_call.1} parent=1 // pred_fallthru
      _
    // Predicated region
    $region54: #{tpu_custom_call.1} parent=1 // pred_check
      _
    $region55: #{tpu_custom_call.1} parent=1 // pred_check_branch
      %965 = sbr.rel (0) target = $region57
    $region56: #{tpu_custom_call.1} parent=1 // pred_region
      _
    $region57: #{tpu_custom_call.1} parent=1 // pred_fallthru
      _
    // Predicated region
    $region58: #{tpu_custom_call.1} parent=1 // pred_check
      _
    $region59: #{tpu_custom_call.1} parent=1 // pred_check_branch
      %967 = sbr.rel (0) target = $region61
    $region60: #{tpu_custom_call.1} parent=1 // pred_region
      %968 = dma.done [#allocation4], 512
    $region61: #{tpu_custom_call.1} parent=1 // pred_fallthru
      _
    // Predicated region
    $region62: #{tpu_custom_call.1} parent=1 // pred_check
      _
    $region63: #{tpu_custom_call.1} parent=1 // pred_check_branch
      %970 = sbr.rel (0) target = $region65
    $region64: #{tpu_custom_call.1} parent=1 // pred_region
      _
    $region65: #{tpu_custom_call.1} parent=1 // pred_fallthru
      _
    %971 = vsyncpa [#allocation3], 1
    %972 = vsyncpa [#allocation6], 1
    %973 = vsyncpa [#allocation9], 1
    %974 = vsyncpa [#allocation4], 1

</llo_original>
